<compile_context>
chip_gen: v5e
topology: v5e:2x2
jax: 0.10.0
libtpu: 0.0.40
codegen_flags: <defaults>
</compile_context>

<pallas_src>
import functools

import jax
import jax.numpy as jnp
from jax import lax
from jax.experimental import pallas as pl
from jax.experimental.pallas import tpu as pltpu


def _mha_kernel(x_ref, wq_ref, bq_ref, wk_ref, bk_ref, wv_ref, bv_ref,
                wo_ref, bo_ref, o_ref, ctx_ref, *, num_heads):
    # x_ref:        (1, N, E)  one batch element (bf16 MXU operand)
    # w{q,k,v,o}:   (E, E)     resident full projection weights (bf16)
    # b{q,k,v,o}:   (1, E)     biases (f32)
    # o_ref:        (1, N, E)  output for this batch element
    # ctx_ref:      (N, E) f32 scratch holding the concatenated per-head context
    N, E = x_ref.shape[1], x_ref.shape[2]
    H = num_heads
    D = E // H
    inv_scale = 1.0 / (float(E) ** 0.5)   # module: softmax(energy) / sqrt(emb_size)

    x = x_ref[0]                                                              # (N, E) bf16

    # Fused, lane-dense projections: one (N,E)@(E,E) per tensor, f32 accumulate.
    q = (jnp.dot(x, wq_ref[...], preferred_element_type=jnp.float32)
         + bq_ref[...]).astype(x.dtype)                                       # (N, E)
    k = (jnp.dot(x, wk_ref[...], preferred_element_type=jnp.float32)
         + bk_ref[...]).astype(x.dtype)                                       # (N, E)
    v = (jnp.dot(x, wv_ref[...], preferred_element_type=jnp.float32)
         + bv_ref[...]).astype(x.dtype)                                       # (N, E)

    # Per-head attention (H is small and static -> unrolled).
    for h in range(H):
        lo, hi = h * D, (h + 1) * D
        q_h = q[:, lo:hi]                                                     # (N, D) bf16
        k_h = k[:, lo:hi]                                                     # (N, D) bf16
        # energy = q_h @ k_h^T (contract head dim; no transpose materialized)
        scores = lax.dot_general(q_h, k_h, (((1,), (1,)), ((), ())),
                                 preferred_element_type=jnp.float32)          # (N, N) f32
        m = jnp.max(scores, axis=-1, keepdims=True)
        e = jnp.exp(scores - m)
        l = jnp.sum(e, axis=-1, keepdims=True)
        # softmax, then the module's post-softmax /sqrt(E), folded into the
        # (N,1) EUP reciprocal -> one broadcast multiply instead of an (N,N) divide.
        att = e * (inv_scale * pl.reciprocal(l, approx=True))
        # TODO(synk): att_drop (p=0 default => identity) and the optional boolean
        #             mask argument (default None) are not implemented.
        ctx_h = jnp.dot(att.astype(x.dtype), v[:, lo:hi],
                        preferred_element_type=jnp.float32)                   # (N, D) f32
        ctx_ref[:, lo:hi] = ctx_h

    # Single lane-dense output projection over the concatenated heads.
    out = jnp.dot(ctx_ref[...].astype(x.dtype), wo_ref[...],
                  preferred_element_type=jnp.float32) + bo_ref[...]           # (N, E) f32
    o_ref[0] = out.astype(o_ref.dtype)


def multi_head_attention(x, wq, bq, wk, bk, wv, bv, wo, bo, *, num_heads,
                         mxu_dtype=jnp.bfloat16):
    """x: (B, N, E); w* are (E, E) stored so that y = x @ w + b (transposed vs torch)."""
    B, N, E = x.shape
    H = num_heads
    assert E % H == 0, "emb_size must be divisible by num_heads"
    out_dtype = x.dtype

    # bf16 MXU operands (cheap casts; in a real model these are prepared once).
    x_mx = x.astype(mxu_dtype)
    wq_mx, wk_mx = wq.astype(mxu_dtype), wk.astype(mxu_dtype)
    wv_mx, wo_mx = wv.astype(mxu_dtype), wo.astype(mxu_dtype)
    bq2 = bq.reshape(1, E).astype(jnp.float32)
    bk2 = bk.reshape(1, E).astype(jnp.float32)
    bv2 = bv.reshape(1, E).astype(jnp.float32)
    bo2 = bo.reshape(1, E).astype(jnp.float32)

    # Weights / biases: constant block index -> fetched once, resident in VMEM.
    w_spec = pl.BlockSpec((E, E), lambda b: (0, 0))
    b_spec = pl.BlockSpec((1, E), lambda b: (0, 0))
    x_spec = pl.BlockSpec((1, N, E), lambda b: (b, 0, 0))

    # VMEM footprint estimate: resident weights + double-buffered x/out blocks
    # + biases + ctx scratch + q/k/v + score/exp intermediates.
    mxu_bytes = jnp.dtype(mxu_dtype).itemsize
    out_bytes = jnp.dtype(out_dtype).itemsize
    est = (4 * E * E * mxu_bytes            # resident weights
           + 4 * E * 4                      # biases
           + 2 * N * E * mxu_bytes * 2      # x, double-buffered
           + 2 * N * E * out_bytes * 2      # out, double-buffered
           + N * E * 4                      # ctx scratch
           + 3 * N * E * mxu_bytes          # q, k, v
           + 2 * N * N * 4)                 # scores + exp
    vmem_limit = int(min(max(2 * est, 32 * 1024 * 1024), 64 * 1024 * 1024))

    kernel = functools.partial(_mha_kernel, num_heads=H)

    return pl.pallas_call(
        kernel,
        out_shape=jax.ShapeDtypeStruct((B, N, E), out_dtype),
        grid_spec=pltpu.PrefetchScalarGridSpec(
            num_scalar_prefetch=0,
            grid=(B,),
            in_specs=[
                x_spec,             # x
                w_spec, b_spec,     # wq, bq
                w_spec, b_spec,     # wk, bk
                w_spec, b_spec,     # wv, bv
                w_spec, b_spec,     # wo, bo
            ],
            out_specs=pl.BlockSpec((1, N, E), lambda b: (b, 0, 0)),
            scratch_shapes=[pltpu.VMEM((N, E), jnp.float32)],
        ),
        compiler_params=pltpu.CompilerParams(
            # Batch axis is data-parallel (megacore on v7x). If B == 1 at large N,
            # a q-tile axis should be promoted to the parallel role instead.
            dimension_semantics=("parallel",),
            vmem_limit_bytes=vmem_limit),
    )(x_mx, wq_mx, bq2, wk_mx, bk2, wv_mx, bv2, wo_mx, bo2)


def _reference(x, wq, bq, wk, bk, wv, bv, wo, bo, num_heads):
    B, N, E = x.shape
    H = num_heads
    D = E // H

    def heads(t):  # 'b n (h d) -> b h n d'
        return jnp.transpose(t.reshape(B, N, H, D), (0, 2, 1, 3))

    q = heads(x @ wq + bq)
    k = heads(x @ wk + bk)
    v = heads(x @ wv + bv)
    energy = jnp.einsum('bhqd,bhkd->bhqk', q, k)
    att = jax.nn.softmax(energy, axis=-1) / (E ** 0.5)
    out = jnp.einsum('bhqk,bhkd->bhqd', att, v)
    out = jnp.transpose(out, (0, 2, 1, 3)).reshape(B, N, E)
    return out @ wo + bo


if __name__ == "__main__":
    # Small shapes consistent with the module: batch=2, seq=8, emb=32, heads=4 (d=8)
    B, N, E, H = 2, 8, 32, 4
    key = jax.random.PRNGKey(0)
    kx, k1, k2, k3, k4, k5, k6, k7, k8 = jax.random.split(key, 9)

    x = jax.random.normal(kx, (B, N, E), dtype=jnp.float32)
    s = 1.0 / (E ** 0.5)
    wq = jax.random.normal(k1, (E, E), dtype=jnp.float32) * s
    bq = jax.random.normal(k2, (E,), dtype=jnp.float32) * 0.01
    wk = jax.random.normal(k3, (E, E), dtype=jnp.float32) * s
    bk = jax.random.normal(k4, (E,), dtype=jnp.float32) * 0.01
    wv = jax.random.normal(k5, (E, E), dtype=jnp.float32) * s
    bv = jax.random.normal(k6, (E,), dtype=jnp.float32) * 0.01
    wo = jax.random.normal(k7, (E, E), dtype=jnp.float32) * s
    bo = jax.random.normal(k8, (E,), dtype=jnp.float32) * 0.01

    out = multi_head_attention(x, wq, bq, wk, bk, wv, bv, wo, bo, num_heads=H)
    out = jax.block_until_ready(out)

    ref = _reference(x, wq, bq, wk, bk, wv, bv, wo, bo, H)
    assert out.shape == (B, N, E)
    # bf16 MXU operands + approx EUP reciprocal vs the all-f32 reference.
    assert jnp.allclose(out, ref, atol=2e-2, rtol=2e-2), "mismatch vs reference"

    print("KERNEL_OK")
</pallas_src>

<mosaic_0001>
module attributes {stable_mosaic.version = 11 : i64} {
  func.func @_mha_kernel(%arg0: i32, %arg1: memref<1x8x32xbf16, #tpu.memory_space<vmem>>, %arg2: memref<32x32xbf16, #tpu.memory_space<vmem>>, %arg3: memref<1x32xf32, #tpu.memory_space<vmem>>, %arg4: memref<32x32xbf16, #tpu.memory_space<vmem>>, %arg5: memref<1x32xf32, #tpu.memory_space<vmem>>, %arg6: memref<32x32xbf16, #tpu.memory_space<vmem>>, %arg7: memref<1x32xf32, #tpu.memory_space<vmem>>, %arg8: memref<32x32xbf16, #tpu.memory_space<vmem>>, %arg9: memref<1x32xf32, #tpu.memory_space<vmem>>, %arg10: memref<1x8x32xf32, #tpu.memory_space<vmem>>, %arg11: memref<8x32xf32, #tpu.memory_space<vmem>>) attributes {dimension_semantics = [#tpu.dimension_semantics<parallel>], iteration_bounds = array<i64: 2>, scalar_prefetch = 0 : i64, scratch_operands = 1 : i64, tpu.core_type = #tpu.core_type<tc>, window_params = [{transform_indices = @transform_0, window_bounds = array<i64: 1, 8, 32>}, {pipeline_mode = #tpu.pipeline_mode<synchronous>, transform_indices = @transform_1, window_bounds = array<i64: 32, 32>}, {pipeline_mode = #tpu.pipeline_mode<synchronous>, transform_indices = @transform_2, window_bounds = array<i64: 1, 32>}, {pipeline_mode = #tpu.pipeline_mode<synchronous>, transform_indices = @transform_3, window_bounds = array<i64: 32, 32>}, {pipeline_mode = #tpu.pipeline_mode<synchronous>, transform_indices = @transform_4, window_bounds = array<i64: 1, 32>}, {pipeline_mode = #tpu.pipeline_mode<synchronous>, transform_indices = @transform_5, window_bounds = array<i64: 32, 32>}, {pipeline_mode = #tpu.pipeline_mode<synchronous>, transform_indices = @transform_6, window_bounds = array<i64: 1, 32>}, {pipeline_mode = #tpu.pipeline_mode<synchronous>, transform_indices = @transform_7, window_bounds = array<i64: 32, 32>}, {pipeline_mode = #tpu.pipeline_mode<synchronous>, transform_indices = @transform_8, window_bounds = array<i64: 1, 32>}, {transform_indices = @transform_9, window_bounds = array<i64: 1, 8, 32>}]} {
    %c0 = arith.constant 0 : index
    %c0_0 = arith.constant 0 : index
    %c0_1 = arith.constant 0 : index
    %0 = vector.load %arg1[%c0, %c0_0, %c0_1] : memref<1x8x32xbf16, #tpu.memory_space<vmem>>, vector<1x8x32xbf16>
    %1 = vector.shape_cast %0 : vector<1x8x32xbf16> to vector<8x32xbf16>
    %c0_2 = arith.constant 0 : index
    %c0_3 = arith.constant 0 : index
    %2 = vector.load %arg2[%c0_2, %c0_3] : memref<32x32xbf16, #tpu.memory_space<vmem>>, vector<32x32xbf16>
    %cst = arith.constant dense<0.000000e+00> : vector<8x32xf32>
    %3 = tpu.matmul %1, %2, %cst {dimension_numbers = #tpu.dot_dimension_numbers<[1], [0], [0], [1], [0, 0, 1, 1], [], []>} : vector<8x32xbf16>, vector<32x32xbf16>, vector<8x32xf32> -> vector<8x32xf32>
    %c0_4 = arith.constant 0 : index
    %c0_5 = arith.constant 0 : index
    %4 = vector.load %arg3[%c0_4, %c0_5] : memref<1x32xf32, #tpu.memory_space<vmem>>, vector<1x32xf32>
    %5 = vector.broadcast %4 : vector<1x32xf32> to vector<8x32xf32>
    %6 = arith.addf %3, %5 : vector<8x32xf32>
    %7 = arith.truncf %6 : vector<8x32xf32> to vector<8x32xbf16>
    %c0_6 = arith.constant 0 : index
    %c0_7 = arith.constant 0 : index
    %8 = vector.load %arg4[%c0_6, %c0_7] : memref<32x32xbf16, #tpu.memory_space<vmem>>, vector<32x32xbf16>
    %cst_8 = arith.constant dense<0.000000e+00> : vector<8x32xf32>
    %9 = tpu.matmul %1, %8, %cst_8 {dimension_numbers = #tpu.dot_dimension_numbers<[1], [0], [0], [1], [0, 0, 1, 1], [], []>} : vector<8x32xbf16>, vector<32x32xbf16>, vector<8x32xf32> -> vector<8x32xf32>
    %c0_9 = arith.constant 0 : index
    %c0_10 = arith.constant 0 : index
    %10 = vector.load %arg5[%c0_9, %c0_10] : memref<1x32xf32, #tpu.memory_space<vmem>>, vector<1x32xf32>
    %11 = vector.broadcast %10 : vector<1x32xf32> to vector<8x32xf32>
    %12 = arith.addf %9, %11 : vector<8x32xf32>
    %13 = arith.truncf %12 : vector<8x32xf32> to vector<8x32xbf16>
    %c0_11 = arith.constant 0 : index
    %c0_12 = arith.constant 0 : index
    %14 = vector.load %arg6[%c0_11, %c0_12] : memref<32x32xbf16, #tpu.memory_space<vmem>>, vector<32x32xbf16>
    %cst_13 = arith.constant dense<0.000000e+00> : vector<8x32xf32>
    %15 = tpu.matmul %1, %14, %cst_13 {dimension_numbers = #tpu.dot_dimension_numbers<[1], [0], [0], [1], [0, 0, 1, 1], [], []>} : vector<8x32xbf16>, vector<32x32xbf16>, vector<8x32xf32> -> vector<8x32xf32>
    %c0_14 = arith.constant 0 : index
    %c0_15 = arith.constant 0 : index
    %16 = vector.load %arg7[%c0_14, %c0_15] : memref<1x32xf32, #tpu.memory_space<vmem>>, vector<1x32xf32>
    %17 = vector.broadcast %16 : vector<1x32xf32> to vector<8x32xf32>
    %18 = arith.addf %15, %17 : vector<8x32xf32>
    %19 = arith.truncf %18 : vector<8x32xf32> to vector<8x32xbf16>
    %20 = vector.extract_strided_slice %7 {offsets = [0, 0], sizes = [8, 8], strides = [1, 1]} : vector<8x32xbf16> to vector<8x8xbf16>
    %21 = vector.extract_strided_slice %13 {offsets = [0, 0], sizes = [8, 8], strides = [1, 1]} : vector<8x32xbf16> to vector<8x8xbf16>
    %cst_16 = arith.constant dense<0.000000e+00> : vector<8x8xf32>
    %22 = tpu.matmul %20, %21, %cst_16 {dimension_numbers = #tpu.dot_dimension_numbers<[1], [1], [0], [0], [0, 0, 1, 0], [], []>} : vector<8x8xbf16>, vector<8x8xbf16>, vector<8x8xf32> -> vector<8x8xf32>
    %cst_17 = arith.constant dense<0xFF800000> : vector<8xf32>
    %23 = vector.multi_reduction <maximumf>, %22, %cst_17 [1] : vector<8x8xf32> to vector<8xf32>
    %24 = vector.shape_cast %23 : vector<8xf32> to vector<8x1xf32>
    %25 = vector.broadcast %24 : vector<8x1xf32> to vector<8x8xf32>
    %26 = arith.subf %22, %25 : vector<8x8xf32>
    %27 = math.exp %26 : vector<8x8xf32>
    %cst_18 = arith.constant dense<0.000000e+00> : vector<8xf32>
    %28 = vector.multi_reduction <add>, %27, %cst_18 [1] : vector<8x8xf32> to vector<8xf32>
    %29 = vector.shape_cast %28 : vector<8xf32> to vector<8x1xf32>
    %30 = tpu.reciprocal %29 {approx = true} : vector<8x1xf32> -> vector<8x1xf32>
    %cst_19 = arith.constant 0.176776692 : f32
    %31 = vector.broadcast %cst_19 : f32 to vector<8x1xf32>
    %32 = arith.mulf %31, %30 : vector<8x1xf32>
    %33 = vector.broadcast %32 : vector<8x1xf32> to vector<8x8xf32>
    %34 = arith.mulf %27, %33 : vector<8x8xf32>
    %35 = arith.truncf %34 : vector<8x8xf32> to vector<8x8xbf16>
    %36 = vector.extract_strided_slice %19 {offsets = [0, 0], sizes = [8, 8], strides = [1, 1]} : vector<8x32xbf16> to vector<8x8xbf16>
    %cst_20 = arith.constant dense<0.000000e+00> : vector<8x8xf32>
    %37 = tpu.matmul %35, %36, %cst_20 {dimension_numbers = #tpu.dot_dimension_numbers<[1], [0], [0], [1], [0, 0, 1, 1], [], []>} : vector<8x8xbf16>, vector<8x8xbf16>, vector<8x8xf32> -> vector<8x8xf32>
    %c0_21 = arith.constant 0 : index
    %c0_22 = arith.constant 0 : index
    %38 = vector.load %arg11[%c0_21, %c0_22] : memref<8x32xf32, #tpu.memory_space<vmem>>, vector<8x8xf32>
    tpu.vector_store %arg11[%c0_21, %c0_22], %37 {strides = array<i32>} : memref<8x32xf32, #tpu.memory_space<vmem>>, vector<8x8xf32>,
    %39 = vector.extract_strided_slice %7 {offsets = [0, 8], sizes = [8, 8], strides = [1, 1]} : vector<8x32xbf16> to vector<8x8xbf16>
    %40 = vector.extract_strided_slice %13 {offsets = [0, 8], sizes = [8, 8], strides = [1, 1]} : vector<8x32xbf16> to vector<8x8xbf16>
    %cst_23 = arith.constant dense<0.000000e+00> : vector<8x8xf32>
    %41 = tpu.matmul %39, %40, %cst_23 {dimension_numbers = #tpu.dot_dimension_numbers<[1], [1], [0], [0], [0, 0, 1, 0], [], []>} : vector<8x8xbf16>, vector<8x8xbf16>, vector<8x8xf32> -> vector<8x8xf32>
    %cst_24 = arith.constant dense<0xFF800000> : vector<8xf32>
    %42 = vector.multi_reduction <maximumf>, %41, %cst_24 [1] : vector<8x8xf32> to vector<8xf32>
    %43 = vector.shape_cast %42 : vector<8xf32> to vector<8x1xf32>
    %44 = vector.broadcast %43 : vector<8x1xf32> to vector<8x8xf32>
    %45 = arith.subf %41, %44 : vector<8x8xf32>
    %46 = math.exp %45 : vector<8x8xf32>
    %cst_25 = arith.constant dense<0.000000e+00> : vector<8xf32>
    %47 = vector.multi_reduction <add>, %46, %cst_25 [1] : vector<8x8xf32> to vector<8xf32>
    %48 = vector.shape_cast %47 : vector<8xf32> to vector<8x1xf32>
    %49 = tpu.reciprocal %48 {approx = true} : vector<8x1xf32> -> vector<8x1xf32>
    %cst_26 = arith.constant 0.176776692 : f32
    %50 = vector.broadcast %cst_26 : f32 to vector<8x1xf32>
    %51 = arith.mulf %50, %49 : vector<8x1xf32>
    %52 = vector.broadcast %51 : vector<8x1xf32> to vector<8x8xf32>
    %53 = arith.mulf %46, %52 : vector<8x8xf32>
    %54 = arith.truncf %53 : vector<8x8xf32> to vector<8x8xbf16>
    %55 = vector.extract_strided_slice %19 {offsets = [0, 8], sizes = [8, 8], strides = [1, 1]} : vector<8x32xbf16> to vector<8x8xbf16>
    %cst_27 = arith.constant dense<0.000000e+00> : vector<8x8xf32>
    %56 = tpu.matmul %54, %55, %cst_27 {dimension_numbers = #tpu.dot_dimension_numbers<[1], [0], [0], [1], [0, 0, 1, 1], [], []>} : vector<8x8xbf16>, vector<8x8xbf16>, vector<8x8xf32> -> vector<8x8xf32>
    %c0_28 = arith.constant 0 : index
    %c8 = arith.constant 8 : index
    %57 = vector.load %arg11[%c0_28, %c8] : memref<8x32xf32, #tpu.memory_space<vmem>>, vector<8x8xf32>
    tpu.vector_store %arg11[%c0_28, %c8], %56 {strides = array<i32>} : memref<8x32xf32, #tpu.memory_space<vmem>>, vector<8x8xf32>,
    %58 = vector.extract_strided_slice %7 {offsets = [0, 16], sizes = [8, 8], strides = [1, 1]} : vector<8x32xbf16> to vector<8x8xbf16>
    %59 = vector.extract_strided_slice %13 {offsets = [0, 16], sizes = [8, 8], strides = [1, 1]} : vector<8x32xbf16> to vector<8x8xbf16>
    %cst_29 = arith.constant dense<0.000000e+00> : vector<8x8xf32>
    %60 = tpu.matmul %58, %59, %cst_29 {dimension_numbers = #tpu.dot_dimension_numbers<[1], [1], [0], [0], [0, 0, 1, 0], [], []>} : vector<8x8xbf16>, vector<8x8xbf16>, vector<8x8xf32> -> vector<8x8xf32>
    %cst_30 = arith.constant dense<0xFF800000> : vector<8xf32>
    %61 = vector.multi_reduction <maximumf>, %60, %cst_30 [1] : vector<8x8xf32> to vector<8xf32>
    %62 = vector.shape_cast %61 : vector<8xf32> to vector<8x1xf32>
    %63 = vector.broadcast %62 : vector<8x1xf32> to vector<8x8xf32>
    %64 = arith.subf %60, %63 : vector<8x8xf32>
    %65 = math.exp %64 : vector<8x8xf32>
    %cst_31 = arith.constant dense<0.000000e+00> : vector<8xf32>
    %66 = vector.multi_reduction <add>, %65, %cst_31 [1] : vector<8x8xf32> to vector<8xf32>
    %67 = vector.shape_cast %66 : vector<8xf32> to vector<8x1xf32>
    %68 = tpu.reciprocal %67 {approx = true} : vector<8x1xf32> -> vector<8x1xf32>
    %cst_32 = arith.constant 0.176776692 : f32
    %69 = vector.broadcast %cst_32 : f32 to vector<8x1xf32>
    %70 = arith.mulf %69, %68 : vector<8x1xf32>
    %71 = vector.broadcast %70 : vector<8x1xf32> to vector<8x8xf32>
    %72 = arith.mulf %65, %71 : vector<8x8xf32>
    %73 = arith.truncf %72 : vector<8x8xf32> to vector<8x8xbf16>
    %74 = vector.extract_strided_slice %19 {offsets = [0, 16], sizes = [8, 8], strides = [1, 1]} : vector<8x32xbf16> to vector<8x8xbf16>
    %cst_33 = arith.constant dense<0.000000e+00> : vector<8x8xf32>
    %75 = tpu.matmul %73, %74, %cst_33 {dimension_numbers = #tpu.dot_dimension_numbers<[1], [0], [0], [1], [0, 0, 1, 1], [], []>} : vector<8x8xbf16>, vector<8x8xbf16>, vector<8x8xf32> -> vector<8x8xf32>
    %c0_34 = arith.constant 0 : index
    %c16 = arith.constant 16 : index
    %76 = vector.load %arg11[%c0_34, %c16] : memref<8x32xf32, #tpu.memory_space<vmem>>, vector<8x8xf32>
    tpu.vector_store %arg11[%c0_34, %c16], %75 {strides = array<i32>} : memref<8x32xf32, #tpu.memory_space<vmem>>, vector<8x8xf32>,
    %77 = vector.extract_strided_slice %7 {offsets = [0, 24], sizes = [8, 8], strides = [1, 1]} : vector<8x32xbf16> to vector<8x8xbf16>
    %78 = vector.extract_strided_slice %13 {offsets = [0, 24], sizes = [8, 8], strides = [1, 1]} : vector<8x32xbf16> to vector<8x8xbf16>
    %cst_35 = arith.constant dense<0.000000e+00> : vector<8x8xf32>
    %79 = tpu.matmul %77, %78, %cst_35 {dimension_numbers = #tpu.dot_dimension_numbers<[1], [1], [0], [0], [0, 0, 1, 0], [], []>} : vector<8x8xbf16>, vector<8x8xbf16>, vector<8x8xf32> -> vector<8x8xf32>
    %cst_36 = arith.constant dense<0xFF800000> : vector<8xf32>
    %80 = vector.multi_reduction <maximumf>, %79, %cst_36 [1] : vector<8x8xf32> to vector<8xf32>
    %81 = vector.shape_cast %80 : vector<8xf32> to vector<8x1xf32>
    %82 = vector.broadcast %81 : vector<8x1xf32> to vector<8x8xf32>
    %83 = arith.subf %79, %82 : vector<8x8xf32>
    %84 = math.exp %83 : vector<8x8xf32>
    %cst_37 = arith.constant dense<0.000000e+00> : vector<8xf32>
    %85 = vector.multi_reduction <add>, %84, %cst_37 [1] : vector<8x8xf32> to vector<8xf32>
    %86 = vector.shape_cast %85 : vector<8xf32> to vector<8x1xf32>
    %87 = tpu.reciprocal %86 {approx = true} : vector<8x1xf32> -> vector<8x1xf32>
    %cst_38 = arith.constant 0.176776692 : f32
    %88 = vector.broadcast %cst_38 : f32 to vector<8x1xf32>
    %89 = arith.mulf %88, %87 : vector<8x1xf32>
    %90 = vector.broadcast %89 : vector<8x1xf32> to vector<8x8xf32>
    %91 = arith.mulf %84, %90 : vector<8x8xf32>
    %92 = arith.truncf %91 : vector<8x8xf32> to vector<8x8xbf16>
    %93 = vector.extract_strided_slice %19 {offsets = [0, 24], sizes = [8, 8], strides = [1, 1]} : vector<8x32xbf16> to vector<8x8xbf16>
    %cst_39 = arith.constant dense<0.000000e+00> : vector<8x8xf32>
    %94 = tpu.matmul %92, %93, %cst_39 {dimension_numbers = #tpu.dot_dimension_numbers<[1], [0], [0], [1], [0, 0, 1, 1], [], []>} : vector<8x8xbf16>, vector<8x8xbf16>, vector<8x8xf32> -> vector<8x8xf32>
    %c0_40 = arith.constant 0 : index
    %c24 = arith.constant 24 : index
    %95 = vector.load %arg11[%c0_40, %c24] : memref<8x32xf32, #tpu.memory_space<vmem>>, vector<8x8xf32>
    tpu.vector_store %arg11[%c0_40, %c24], %94 {strides = array<i32>} : memref<8x32xf32, #tpu.memory_space<vmem>>, vector<8x8xf32>,
    %c0_41 = arith.constant 0 : index
    %c0_42 = arith.constant 0 : index
    %96 = vector.load %arg11[%c0_41, %c0_42] : memref<8x32xf32, #tpu.memory_space<vmem>>, vector<8x32xf32>
    %97 = arith.truncf %96 : vector<8x32xf32> to vector<8x32xbf16>
    %c0_43 = arith.constant 0 : index
    %c0_44 = arith.constant 0 : index
    %98 = vector.load %arg8[%c0_43, %c0_44] : memref<32x32xbf16, #tpu.memory_space<vmem>>, vector<32x32xbf16>
    %cst_45 = arith.constant dense<0.000000e+00> : vector<8x32xf32>
    %99 = tpu.matmul %97, %98, %cst_45 {dimension_numbers = #tpu.dot_dimension_numbers<[1], [0], [0], [1], [0, 0, 1, 1], [], []>} : vector<8x32xbf16>, vector<32x32xbf16>, vector<8x32xf32> -> vector<8x32xf32>
    %c0_46 = arith.constant 0 : index
    %c0_47 = arith.constant 0 : index
    %100 = vector.load %arg9[%c0_46, %c0_47] : memref<1x32xf32, #tpu.memory_space<vmem>>, vector<1x32xf32>
    %101 = vector.broadcast %100 : vector<1x32xf32> to vector<8x32xf32>
    %102 = arith.addf %99, %101 : vector<8x32xf32>
    %c0_48 = arith.constant 0 : index
    %c0_49 = arith.constant 0 : index
    %c0_50 = arith.constant 0 : index
    %103 = vector.load %arg10[%c0_48, %c0_49, %c0_50] : memref<1x8x32xf32, #tpu.memory_space<vmem>>, vector<1x8x32xf32>
    %104 = vector.shape_cast %103 : vector<1x8x32xf32> to vector<8x32xf32>
    %105 = vector.shape_cast %102 : vector<8x32xf32> to vector<1x8x32xf32>
    tpu.vector_store %arg10[%c0_48, %c0_49, %c0_50], %105 {strides = array<i32>} : memref<1x8x32xf32, #tpu.memory_space<vmem>>, vector<1x8x32xf32>,
    return
  }
  func.func @transform_0(%arg0: i32) -> (i32, i32, i32) {
    %c0_i32 = arith.constant 0 : i32
    %c0_i32_0 = arith.constant 0 : i32
    %c0_i32_1 = arith.constant 0 : i32
    return %arg0, %c0_i32, %c0_i32_0 : i32, i32, i32
  }
  func.func @transform_1(%arg0: i32) -> (i32, i32) {
    %c0_i32 = arith.constant 0 : i32
    %c0_i32_0 = arith.constant 0 : i32
    %c0_i32_1 = arith.constant 0 : i32
    return %c0_i32, %c0_i32_0 : i32, i32
  }
  func.func @transform_2(%arg0: i32) -> (i32, i32) {
    %c0_i32 = arith.constant 0 : i32
    %c0_i32_0 = arith.constant 0 : i32
    %c0_i32_1 = arith.constant 0 : i32
    return %c0_i32, %c0_i32_0 : i32, i32
  }
  func.func @transform_3(%arg0: i32) -> (i32, i32) {
    %c0_i32 = arith.constant 0 : i32
    %c0_i32_0 = arith.constant 0 : i32
    %c0_i32_1 = arith.constant 0 : i32
    return %c0_i32, %c0_i32_0 : i32, i32
  }
  func.func @transform_4(%arg0: i32) -> (i32, i32) {
    %c0_i32 = arith.constant 0 : i32
    %c0_i32_0 = arith.constant 0 : i32
    %c0_i32_1 = arith.constant 0 : i32
    return %c0_i32, %c0_i32_0 : i32, i32
  }
  func.func @transform_5(%arg0: i32) -> (i32, i32) {
    %c0_i32 = arith.constant 0 : i32
    %c0_i32_0 = arith.constant 0 : i32
    %c0_i32_1 = arith.constant 0 : i32
    return %c0_i32, %c0_i32_0 : i32, i32
  }
  func.func @transform_6(%arg0: i32) -> (i32, i32) {
    %c0_i32 = arith.constant 0 : i32
    %c0_i32_0 = arith.constant 0 : i32
    %c0_i32_1 = arith.constant 0 : i32
    return %c0_i32, %c0_i32_0 : i32, i32
  }
  func.func @transform_7(%arg0: i32) -> (i32, i32) {
    %c0_i32 = arith.constant 0 : i32
    %c0_i32_0 = arith.constant 0 : i32
    %c0_i32_1 = arith.constant 0 : i32
    return %c0_i32, %c0_i32_0 : i32, i32
  }
  func.func @transform_8(%arg0: i32) -> (i32, i32) {
    %c0_i32 = arith.constant 0 : i32
    %c0_i32_0 = arith.constant 0 : i32
    %c0_i32_1 = arith.constant 0 : i32
    return %c0_i32, %c0_i32_0 : i32, i32
  }
  func.func @transform_9(%arg0: i32) -> (i32, i32, i32) {
    %c0_i32 = arith.constant 0 : i32
    %c0_i32_0 = arith.constant 0 : i32
    %c0_i32_1 = arith.constant 0 : i32
    return %arg0, %c0_i32, %c0_i32_0 : i32, i32, i32
  }
}

</mosaic_0001>

<llo_original>
// kernel: tpu_custom_call.1
$region0: #{tpu_custom_call.1}
  #allocation0 [shape = 'u32[]', space=smem, size = 0x4, offset = 0x4, fixed_abs, tag = 'smem constant byte address 0x4 - core index']
  #allocation1 [shape = 'u32[72,128]{1,0:T(1,128)}', space=vmem, size = 0x9000, scoped, tag = 'internal scratch']
  #allocation2 [shape = 'f32[8,32]{1,0:T(8,128)}', space=vmem, size = 0x1000, scoped, tag = 'scratch operand']
  %s0 = inlined_call_operand.hbm [shape: bf16[2,8,32], index: 0, kind: input, shape index: {}]
  %s1 = inlined_call_operand.hbm [shape: bf16[32,32], index: 1, kind: input, shape index: {}]
  %s2 = inlined_call_operand.vmem [shape: f32[1,32], index: 2, kind: input, shape index: {}]
  %s3 = inlined_call_operand.hbm [shape: bf16[32,32], index: 3, kind: input, shape index: {}]
  %s4 = inlined_call_operand.vmem [shape: f32[1,32], index: 4, kind: input, shape index: {}]
  %s5 = inlined_call_operand.hbm [shape: bf16[32,32], index: 5, kind: input, shape index: {}]
  %s6 = inlined_call_operand.vmem [shape: f32[1,32], index: 6, kind: input, shape index: {}]
  %s7 = inlined_call_operand.hbm [shape: bf16[32,32], index: 7, kind: input, shape index: {}]
  %s8 = inlined_call_operand.vmem [shape: f32[1,32], index: 8, kind: input, shape index: {}]
  %s9 = inlined_call_operand.hbm [shape: f32[2,8,32], index: 9, kind: output, shape index: {}]
  %s10 = sld [smem:[#allocation0]]
  $region89: #{tpu_custom_call.1} parent=0
    _
  %s12 = ssub.s32 1, %s10
  %s13 = scalar_select 0, %s12, %s10
  $region1: #{tpu_custom_call.1} parent=0
    #allocation3 [shape = 'u8[4096]{0}', space=vmem, size = 0x1000, scoped, tag = 'input window, operand 0']
    #allocation4 [shape = 's32[2]{0}', space=sflag, size = 0x8, scoped, tag = 'scoped memory for tpu_custom_call.1']
    #allocation5 [shape = 's32[2]{0}', space=sflag, size = 0x8, scoped, tag = 'scoped memory for tpu_custom_call.1']
    #allocation6 [shape = 'u8[8192]{0}', space=vmem, size = 0x2000, scoped, tag = 'input window, operand 1, single buffered']
    #allocation7 [shape = 's32[1]{0}', space=sflag, size = 0x4, scoped, tag = 'scoped memory for tpu_custom_call.1']
    #allocation8 [shape = 'u8[8192]{0}', space=vmem, size = 0x2000, scoped, tag = 'input window, operand 3, single buffered']
    #allocation9 [shape = 'u8[8192]{0}', space=vmem, size = 0x2000, scoped, tag = 'input window, operand 5, single buffered']
    #allocation10 [shape = 's32[1]{0}', space=sflag, size = 0x4, scoped, tag = 'scoped memory for tpu_custom_call.1']
    #allocation11 [shape = 'u8[8192]{0}', space=vmem, size = 0x2000, scoped, tag = 'input window, operand 7, single buffered']
    #allocation12 [shape = 'u8[8192]{0}', space=vmem, size = 0x2000, scoped, tag = 'output window, operand 0']
    %14 = vsyncpa [#allocation4], 0
    %s15 = scalar_lea.sflag [#allocation4], 1
    %16 = vsyncpa %s15, 0
    %17 = vsyncpa [#allocation7], 0
    %18 = vsyncpa [#allocation10], 0
    %19 = vsyncpa [#allocation5], 0
    %s20 = scalar_lea.sflag [#allocation5], 1
    %21 = vsyncpa %s20, 0
    loop: start=0, step=1, limit=4
    $region2: #{tpu_custom_call.1} parent=1 // loop_pre_header
      _
    $region3: #{tpu_custom_call.1} parent=1 // loop_header
      %s23 = sphi 0, %s27
      %p24 = scmp.ge.s32.totalorder %s23, 4
      %s33 = sphi 0, %s35
      %s36 = sphi 0, %s33
      %s37 = sphi 0, %s36
      %s53 = sphi 0, %s37
      %s57 = sphi 0, %s57
      %s59 = sphi 0, %s57
      %s60 = sphi 0, %s59
      %s74 = sphi 0, %s60
      %s78 = sphi 0, %s78
      %s80 = sphi 0, %s78
      %s81 = sphi 0, %s80
      %s95 = sphi 0, %s81
      %s99 = sphi 0, %s99
      %s101 = sphi 0, %s99
      %s102 = sphi 0, %s101
      %s116 = sphi 0, %s102
      %s120 = sphi 0, %s120
      %s122 = sphi 0, %s120
      %s123 = sphi 0, %s122
      %s137 = sphi 0, %s123
      %s141 = sphi 0, %s141
      %s143 = sphi 0, %s141
      %s144 = sphi 0, %s143
      %s158 = sphi 0, %s144
      %s162 = sphi 0, %s162
      %s164 = sphi 0, %s162
      %s165 = sphi 0, %s164
      %s179 = sphi 0, %s165
      %s183 = sphi 0, %s183
      %s185 = sphi 0, %s183
      %s186 = sphi 0, %s185
      %s200 = sphi 0, %s186
      %s204 = sphi 0, %s204
      %s206 = sphi 0, %s204
      %s207 = sphi 0, %s206
      %s221 = sphi 0, %s207
      %s227 = sphi 0, %s229
      %s230 = sphi 0, %s227
      %s231 = sphi 0, %s230
      %s247 = sphi 0, %s231
    $region4: #{tpu_custom_call.1} parent=1 // loop_header_branch
      %26 = sbr.rel (%p24) target = $region8
    $region5: #{tpu_custom_call.1} parent=1 // loop_body
      %s28 = ssub.s32 %s23, 1
      %s29 = ssub.s32 %s23, 2
      %s30 = sadd.s32 %s23, 1
      %s31 = ssub.s32 %s23, %s30
      %p32 = scmp.eq.s32.totalorder %s31, 0
      %s34 = sadd.s32 %s33, 1
      %s35 = scalar_select %p32, %s33, %s34
      %p38 = pneg %p32
      %p39 = scmp.eq.s32.totalorder %s23, 1
      %p40 = por %p38, %p39
      %p41 = scmp.ne.s32.totalorder %s33, %s36
      %p42 = scmp.eq.s32.totalorder %s23, 0
      %p43 = por %p41, %p42
      %p44 = scmp.ne.s32.totalorder %s33, %s36
      %p45 = scmp.eq.s32.totalorder %s28, 1
      %p46 = por %p44, %p45
      %p47 = scmp.ne.s32.totalorder %s36, %s37
      %p48 = scmp.eq.s32.totalorder %s28, 0
      %p49 = por %p47, %p48
      %p50 = scmp.ne.s32.totalorder %s36, %s37
      %p51 = scmp.eq.s32.totalorder %s29, 1
      %p52 = por %p50, %p51
      %p54 = scmp.ne.s32.totalorder %s37, %s53
      %p55 = scmp.eq.s32.totalorder %s29, 0
      %p56 = por %p54, %p55
      %s58 = sadd.s32 %s57, 1
      %p61 = scmp.eq.s32.totalorder %s23, 1
      %p62 = scmp.ne.s32.totalorder %s57, %s59
      %p63 = scmp.eq.s32.totalorder %s23, 0
      %p64 = por %p62, %p63
      %p65 = scmp.ne.s32.totalorder %s57, %s59
      %p66 = scmp.eq.s32.totalorder %s28, 1
      %p67 = por %p65, %p66
      %p68 = scmp.ne.s32.totalorder %s59, %s60
      %p69 = scmp.eq.s32.totalorder %s28, 0
      %p70 = por %p68, %p69
      %p71 = scmp.ne.s32.totalorder %s59, %s60
      %p72 = scmp.eq.s32.totalorder %s29, 1
      %p73 = por %p71, %p72
      %p75 = scmp.ne.s32.totalorder %s60, %s74
      %p76 = scmp.eq.s32.totalorder %s29, 0
      %p77 = por %p75, %p76
      %s79 = sadd.s32 %s78, 1
      %p82 = scmp.eq.s32.totalorder %s23, 1
      %p83 = scmp.ne.s32.totalorder %s78, %s80
      %p84 = scmp.eq.s32.totalorder %s23, 0
      %p85 = por %p83, %p84
      %p86 = scmp.ne.s32.totalorder %s78, %s80
      %p87 = scmp.eq.s32.totalorder %s28, 1
      %p88 = por %p86, %p87
      %p89 = scmp.ne.s32.totalorder %s80, %s81
      %p90 = scmp.eq.s32.totalorder %s28, 0
      %p91 = por %p89, %p90
      %p92 = scmp.ne.s32.totalorder %s80, %s81
      %p93 = scmp.eq.s32.totalorder %s29, 1
      %p94 = por %p92, %p93
      %p96 = scmp.ne.s32.totalorder %s81, %s95
      %p97 = scmp.eq.s32.totalorder %s29, 0
      %p98 = por %p96, %p97
      %s100 = sadd.s32 %s99, 1
      %p103 = scmp.eq.s32.totalorder %s23, 1
      %p104 = scmp.ne.s32.totalorder %s99, %s101
      %p105 = scmp.eq.s32.totalorder %s23, 0
      %p106 = por %p104, %p105
      %p107 = scmp.ne.s32.totalorder %s99, %s101
      %p108 = scmp.eq.s32.totalorder %s28, 1
      %p109 = por %p107, %p108
      %p110 = scmp.ne.s32.totalorder %s101, %s102
      %p111 = scmp.eq.s32.totalorder %s28, 0
      %p112 = por %p110, %p111
      %p113 = scmp.ne.s32.totalorder %s101, %s102
      %p114 = scmp.eq.s32.totalorder %s29, 1
      %p115 = por %p113, %p114
      %p117 = scmp.ne.s32.totalorder %s102, %s116
      %p118 = scmp.eq.s32.totalorder %s29, 0
      %p119 = por %p117, %p118
      %s121 = sadd.s32 %s120, 1
      %p124 = scmp.eq.s32.totalorder %s23, 1
      %p125 = scmp.ne.s32.totalorder %s120, %s122
      %p126 = scmp.eq.s32.totalorder %s23, 0
      %p127 = por %p125, %p126
      %p128 = scmp.ne.s32.totalorder %s120, %s122
      %p129 = scmp.eq.s32.totalorder %s28, 1
      %p130 = por %p128, %p129
      %p131 = scmp.ne.s32.totalorder %s122, %s123
      %p132 = scmp.eq.s32.totalorder %s28, 0
      %p133 = por %p131, %p132
      %p134 = scmp.ne.s32.totalorder %s122, %s123
      %p135 = scmp.eq.s32.totalorder %s29, 1
      %p136 = por %p134, %p135
      %p138 = scmp.ne.s32.totalorder %s123, %s137
      %p139 = scmp.eq.s32.totalorder %s29, 0
      %p140 = por %p138, %p139
      %s142 = sadd.s32 %s141, 1
      %p145 = scmp.eq.s32.totalorder %s23, 1
      %p146 = scmp.ne.s32.totalorder %s141, %s143
      %p147 = scmp.eq.s32.totalorder %s23, 0
      %p148 = por %p146, %p147
      %p149 = scmp.ne.s32.totalorder %s141, %s143
      %p150 = scmp.eq.s32.totalorder %s28, 1
      %p151 = por %p149, %p150
      %p152 = scmp.ne.s32.totalorder %s143, %s144
      %p153 = scmp.eq.s32.totalorder %s28, 0
      %p154 = por %p152, %p153
      %p155 = scmp.ne.s32.totalorder %s143, %s144
      %p156 = scmp.eq.s32.totalorder %s29, 1
      %p157 = por %p155, %p156
      %p159 = scmp.ne.s32.totalorder %s144, %s158
      %p160 = scmp.eq.s32.totalorder %s29, 0
      %p161 = por %p159, %p160
      %s163 = sadd.s32 %s162, 1
      %p166 = scmp.eq.s32.totalorder %s23, 1
      %p167 = scmp.ne.s32.totalorder %s162, %s164
      %p168 = scmp.eq.s32.totalorder %s23, 0
      %p169 = por %p167, %p168
      %p170 = scmp.ne.s32.totalorder %s162, %s164
      %p171 = scmp.eq.s32.totalorder %s28, 1
      %p172 = por %p170, %p171
      %p173 = scmp.ne.s32.totalorder %s164, %s165
      %p174 = scmp.eq.s32.totalorder %s28, 0
      %p175 = por %p173, %p174
      %p176 = scmp.ne.s32.totalorder %s164, %s165
      %p177 = scmp.eq.s32.totalorder %s29, 1
      %p178 = por %p176, %p177
      %p180 = scmp.ne.s32.totalorder %s165, %s179
      %p181 = scmp.eq.s32.totalorder %s29, 0
      %p182 = por %p180, %p181
      %s184 = sadd.s32 %s183, 1
      %p187 = scmp.eq.s32.totalorder %s23, 1
      %p188 = scmp.ne.s32.totalorder %s183, %s185
      %p189 = scmp.eq.s32.totalorder %s23, 0
      %p190 = por %p188, %p189
      %p191 = scmp.ne.s32.totalorder %s183, %s185
      %p192 = scmp.eq.s32.totalorder %s28, 1
      %p193 = por %p191, %p192
      %p194 = scmp.ne.s32.totalorder %s185, %s186
      %p195 = scmp.eq.s32.totalorder %s28, 0
      %p196 = por %p194, %p195
      %p197 = scmp.ne.s32.totalorder %s185, %s186
      %p198 = scmp.eq.s32.totalorder %s29, 1
      %p199 = por %p197, %p198
      %p201 = scmp.ne.s32.totalorder %s186, %s200
      %p202 = scmp.eq.s32.totalorder %s29, 0
      %p203 = por %p201, %p202
      %s205 = sadd.s32 %s204, 1
      %p208 = scmp.eq.s32.totalorder %s23, 1
      %p209 = scmp.ne.s32.totalorder %s204, %s206
      %p210 = scmp.eq.s32.totalorder %s23, 0
      %p211 = por %p209, %p210
      %p212 = scmp.ne.s32.totalorder %s204, %s206
      %p213 = scmp.eq.s32.totalorder %s28, 1
      %p214 = por %p212, %p213
      %p215 = scmp.ne.s32.totalorder %s206, %s207
      %p216 = scmp.eq.s32.totalorder %s28, 0
      %p217 = por %p215, %p216
      %p218 = scmp.ne.s32.totalorder %s206, %s207
      %p219 = scmp.eq.s32.totalorder %s29, 1
      %p220 = por %p218, %p219
      %p222 = scmp.ne.s32.totalorder %s207, %s221
      %p223 = scmp.eq.s32.totalorder %s29, 0
      %p224 = por %p222, %p223
      %s225 = ssub.s32 %s23, %s30
      %p226 = scmp.eq.s32.totalorder %s225, 0
      %s228 = sadd.s32 %s227, 1
      %s229 = scalar_select %p226, %s227, %s228
      %p232 = pneg %p226
      %p233 = scmp.eq.s32.totalorder %s23, 1
      %p234 = por %p232, %p233
      %p235 = scmp.ne.s32.totalorder %s227, %s230
      %p236 = scmp.eq.s32.totalorder %s23, 0
      %p237 = por %p235, %p236
      %p238 = scmp.ne.s32.totalorder %s227, %s230
      %p239 = scmp.eq.s32.totalorder %s28, 1
      %p240 = por %p238, %p239
      %p241 = scmp.ne.s32.totalorder %s230, %s231
      %p242 = scmp.eq.s32.totalorder %s28, 0
      %p243 = por %p241, %p242
      %p244 = scmp.ne.s32.totalorder %s230, %s231
      %p245 = scmp.eq.s32.totalorder %s29, 1
      %p246 = por %p244, %p245
      %p248 = scmp.ne.s32.totalorder %s231, %s247
      %p249 = scmp.eq.s32.totalorder %s29, 0
      %p250 = por %p248, %p249
      %p251 = scmp.le.s32.totalorder 1, %s23
      %p252 = scmp.lt.s32.totalorder %s23, 3
      %p253 = pnand %p251, %p252
      %p254 = pneg %p253
      // Predicated region
      $region9: #{tpu_custom_call.1} parent=5 // pred_check
        _
      $region10: #{tpu_custom_call.1} parent=5 // pred_check_branch
        %256 = sbr.rel (%p253) target = $region12
      $region11: #{tpu_custom_call.1} parent=5 // pred_region
        %s257 = ssub.s32 %s23, 1
        // Predicated region
        $region13: #{tpu_custom_call.1} parent=11 // pred_check
          %p258 = pneg %p70
        $region14: #{tpu_custom_call.1} parent=11 // pred_check_branch
          %260 = sbr.rel (%p258) target = $region16
        $region15: #{tpu_custom_call.1} parent=11 // pred_region
          %262 = vsyncadd [#allocation7], 0
          %s263 = sshll.u32 %s1, 4
          %s264 = int_to_ptr.hbm [resolvable:$true] %s263
          %s265 = sshll.u32 [#allocation6], 4
          %s266 = int_to_ptr.vmem [resolvable:$true] %s265
          %271 = dma.hbm_to_vmem [thread:$0]  %s264, 256, %s266, [#allocation7], 64, 64, 4
        $region16: #{tpu_custom_call.1} parent=11 // pred_fallthru
          _
        // Predicated region
        $region17: #{tpu_custom_call.1} parent=11 // pred_check
          %p272 = pneg %p91
        $region18: #{tpu_custom_call.1} parent=11 // pred_check_branch
          %274 = sbr.rel (%p272) target = $region20
        $region19: #{tpu_custom_call.1} parent=11 // pred_region
          _
        $region20: #{tpu_custom_call.1} parent=11 // pred_fallthru
          _
        // Predicated region
        $region21: #{tpu_custom_call.1} parent=11 // pred_check
          %p275 = pneg %p112
        $region22: #{tpu_custom_call.1} parent=11 // pred_check_branch
          %277 = sbr.rel (%p275) target = $region24
        $region23: #{tpu_custom_call.1} parent=11 // pred_region
          %279 = vsyncadd [#allocation7], 0
          %s280 = sshll.u32 %s3, 4
          %s281 = int_to_ptr.hbm [resolvable:$true] %s280
          %s282 = sshll.u32 [#allocation8], 4
          %s283 = int_to_ptr.vmem [resolvable:$true] %s282
          %288 = dma.hbm_to_vmem [thread:$0]  %s281, 256, %s283, [#allocation7], 64, 64, 4
        $region24: #{tpu_custom_call.1} parent=11 // pred_fallthru
          _
        // Predicated region
        $region25: #{tpu_custom_call.1} parent=11 // pred_check
          %p289 = pneg %p133
        $region26: #{tpu_custom_call.1} parent=11 // pred_check_branch
          %291 = sbr.rel (%p289) target = $region28
        $region27: #{tpu_custom_call.1} parent=11 // pred_region
          _
        $region28: #{tpu_custom_call.1} parent=11 // pred_fallthru
          _
        // Predicated region
        $region29: #{tpu_custom_call.1} parent=11 // pred_check
          %p292 = pneg %p154
        $region30: #{tpu_custom_call.1} parent=11 // pred_check_branch
          %294 = sbr.rel (%p292) target = $region32
        $region31: #{tpu_custom_call.1} parent=11 // pred_region
          %296 = vsyncadd [#allocation10], 0
          %s297 = sshll.u32 %s5, 4
          %s298 = int_to_ptr.hbm [resolvable:$true] %s297
          %s299 = sshll.u32 [#allocation9], 4
          %s300 = int_to_ptr.vmem [resolvable:$true] %s299
          %305 = dma.hbm_to_vmem [thread:$0]  %s298, 256, %s300, [#allocation10], 64, 64, 4
        $region32: #{tpu_custom_call.1} parent=11 // pred_fallthru
          _
        // Predicated region
        $region33: #{tpu_custom_call.1} parent=11 // pred_check
          %p306 = pneg %p175
        $region34: #{tpu_custom_call.1} parent=11 // pred_check_branch
          %308 = sbr.rel (%p306) target = $region36
        $region35: #{tpu_custom_call.1} parent=11 // pred_region
          _
        $region36: #{tpu_custom_call.1} parent=11 // pred_fallthru
          _
        // Predicated region
        $region37: #{tpu_custom_call.1} parent=11 // pred_check
          %p309 = pneg %p196
        $region38: #{tpu_custom_call.1} parent=11 // pred_check_branch
          %311 = sbr.rel (%p309) target = $region40
        $region39: #{tpu_custom_call.1} parent=11 // pred_region
          %313 = vsyncadd [#allocation10], 0
          %s314 = sshll.u32 %s7, 4
          %s315 = int_to_ptr.hbm [resolvable:$true] %s314
          %s316 = sshll.u32 [#allocation11], 4
          %s317 = int_to_ptr.vmem [resolvable:$true] %s316
          %322 = dma.hbm_to_vmem [thread:$0]  %s315, 256, %s317, [#allocation10], 64, 64, 4
        $region40: #{tpu_custom_call.1} parent=11 // pred_fallthru
          _
        // Predicated region
        $region41: #{tpu_custom_call.1} parent=11 // pred_check
          %p323 = pneg %p217
        $region42: #{tpu_custom_call.1} parent=11 // pred_check_branch
          %325 = sbr.rel (%p323) target = $region44
        $region43: #{tpu_custom_call.1} parent=11 // pred_region
          _
        $region44: #{tpu_custom_call.1} parent=11 // pred_fallthru
          _
      $region12: #{tpu_custom_call.1} parent=5 // pred_fallthru
        _
      %p326 = scmp.lt.s32.totalorder %s23, 2
      // Predicated region
      $region45: #{tpu_custom_call.1} parent=5 // pred_check
        %p327 = pneg %p326
      $region46: #{tpu_custom_call.1} parent=5 // pred_check_branch
        %329 = sbr.rel (%p327) target = $region48
      $region47: #{tpu_custom_call.1} parent=5 // pred_region
        // Predicated region
        $region49: #{tpu_custom_call.1} parent=47 // pred_check
          %p330 = pneg %p43
        $region50: #{tpu_custom_call.1} parent=47 // pred_check_branch
          %332 = sbr.rel (%p330) target = $region52
        $region51: #{tpu_custom_call.1} parent=47 // pred_region
          %s333 = sand.u32 %s33, 1
          %s334 = scalar_lea.sflag [#allocation4], %s333
          %s335 = sand.u32 %s33, 1
          %s336 = smul.addr %s335, 4
          %s337 = scalar_lea.vmem [#allocation3], %s336
          %339 = vsyncadd %s334, 0
          %s340 = smul.addr %s23, 4
          %s341 = scalar_lea.hbm %s0, %s340
          %s343 = sshll.u32 %s341, 4
          %s344 = int_to_ptr.hbm [resolvable:$true] %s343
          %s345 = sshll.u32 %s337, 4
          %s346 = int_to_ptr.vmem [resolvable:$true] %s345
          %348 = dma.hbm_to_vmem [thread:$0]  %s344, 64, %s346, %s334
        $region52: #{tpu_custom_call.1} parent=47 // pred_fallthru
          _
      $region48: #{tpu_custom_call.1} parent=5 // pred_fallthru
        _
      %p349 = scmp.le.s32.totalorder 1, %s23
      %p350 = scmp.lt.s32.totalorder %s23, 3
      %p351 = pnand %p349, %p350
      %p352 = pneg %p351
      // Predicated region
      $region53: #{tpu_custom_call.1} parent=5 // pred_check
        _
      $region54: #{tpu_custom_call.1} parent=5 // pred_check_branch
        %354 = sbr.rel (%p351) target = $region56
      $region55: #{tpu_custom_call.1} parent=5 // pred_region
        %s355 = ssub.s32 %s23, 1
        %s356 = sand.u32 %s36, 1
        %s357 = scalar_lea.sflag [#allocation4], %s356
        %s358 = sand.u32 %s36, 1
        %s359 = smul.addr %s358, 4
        %s360 = scalar_lea.vmem [#allocation3], %s359
        // Predicated region
        $region57: #{tpu_custom_call.1} parent=55 // pred_check
          %p361 = pneg %p49
        $region58: #{tpu_custom_call.1} parent=55 // pred_check_branch
          %363 = sbr.rel (%p361) target = $region60
        $region59: #{tpu_custom_call.1} parent=55 // pred_region
          %365 = dma.done %s357, 64
        $region60: #{tpu_custom_call.1} parent=55 // pred_fallthru
          _
        // Predicated region
        $region61: #{tpu_custom_call.1} parent=55 // pred_check
          %p366 = pneg %p70
        $region62: #{tpu_custom_call.1} parent=55 // pred_check_branch
          %368 = sbr.rel (%p366) target = $region64
        $region63: #{tpu_custom_call.1} parent=55 // pred_region
          %370 = dma.done [#allocation7], 256
        $region64: #{tpu_custom_call.1} parent=55 // pred_fallthru
          _
        // Predicated region
        $region65: #{tpu_custom_call.1} parent=55 // pred_check
          %p371 = pneg %p112
        $region66: #{tpu_custom_call.1} parent=55 // pred_check_branch
          %373 = sbr.rel (%p371) target = $region68
        $region67: #{tpu_custom_call.1} parent=55 // pred_region
          %375 = dma.done [#allocation7], 256
        $region68: #{tpu_custom_call.1} parent=55 // pred_fallthru
          _
        // Predicated region
        $region69: #{tpu_custom_call.1} parent=55 // pred_check
          %p376 = pneg %p154
        $region70: #{tpu_custom_call.1} parent=55 // pred_check_branch
          %378 = sbr.rel (%p376) target = $region72
        $region71: #{tpu_custom_call.1} parent=55 // pred_region
          %380 = dma.done [#allocation10], 256
        $region72: #{tpu_custom_call.1} parent=55 // pred_fallthru
          _
        // Predicated region
        $region73: #{tpu_custom_call.1} parent=55 // pred_check
          %p381 = pneg %p196
        $region74: #{tpu_custom_call.1} parent=55 // pred_check_branch
          %383 = sbr.rel (%p381) target = $region76
        $region75: #{tpu_custom_call.1} parent=55 // pred_region
          %385 = dma.done [#allocation10], 256
        $region76: #{tpu_custom_call.1} parent=55 // pred_fallthru
          _
        %s386 = sand.u32 %s36, 1
        %s387 = scalar_lea.sflag [#allocation4], %s386
        %s388 = sand.u32 %s36, 1
        %s389 = smul.addr %s388, 4
        %s390 = scalar_lea.vmem [#allocation3], %s389
        %p391 = pneg %p49
        %p392 = pneg %p46
        %p393 = pneg %p70
        %p394 = pneg %p67
        %p395 = pneg %p91
        %p396 = pneg %p88
        %p397 = pneg %p112
        %p398 = pneg %p109
        %p399 = pneg %p133
        %p400 = pneg %p130
        %p401 = pneg %p154
        %p402 = pneg %p151
        %p403 = pneg %p175
        %p404 = pneg %p172
        %p405 = pneg %p196
        %p406 = pneg %p193
        %p407 = pneg %p217
        %p408 = pneg %p214
        %p409 = pneg %p243
        %p410 = pneg %p240
        %s411 = sand.u32 %s230, 1
        %s412 = scalar_lea.sflag [#allocation5], %s411
        %s413 = sand.u32 %s230, 1
        %s414 = smul.addr %s413, 8
        %s415 = scalar_lea.vmem [#allocation12], %s414
        %v417 = vld [vmem:[%s360] sm:$0xf]
        %v418 = vld [vmem:[#allocation6] sm:$0xf]
        %v419 = vld [vmem:[#allocation6 + $0x4] sm:$0xf]
        %v420 = vld [vmem:[#allocation6 + $0x8] sm:$0xf]
        %v421 = vld [vmem:[#allocation6 + $0xc] sm:$0xf]
        %v422 = vld [vmem:[%s2] sm:$0x1]
        %v424 = vperm.slane %v422, 0
        %v430 = vunpack.c.l.b16 %v418
        %v431 = vunpack.c.l.b16 %v419
        %v432 = vunpack.c.l.b16 %v420
        %v433 = vunpack.c.l.b16 %v421
        %v434 = vpack.c.b16 %v431, %v430
        %v435 = vpack.c.b16 %v433, %v432
        %vm438 = vcmask 261120
        %v440 = vsel %vm438, %v417, 0
        %442 = vmatpush.bf16.msra.mxu0 0
        %443 = vmatpush.bf16.msra.mxu0 0
        %444 = vmatpush.bf16.msra.mxu0 0
        %445 = vmatpush.bf16.msra.mxu0 0
        %446 = vmatpush.bf16.msra.mxu0 0
        %447 = vmatpush.bf16.msra.mxu0 0
        %448 = vmatpush.bf16.msra.mxu0 %v435
        %449 = vmatpush.bf16.msra.mxu0 %v434
        %450 = vmatmul.bf16.gmra.mxu0 %v440
        %v451 = vpop.f32.mrf.mxu0
        %v452 = vadd.f32 %v424, %v451
        %v453 = vpop.f32.mrf.mxu0
        %454 = vdwg.mxu0
        %v455 = vpack.c.bf16 %v452, %v452
        %v456 = vld [vmem:[#allocation8] sm:$0xf]
        %v457 = vld [vmem:[#allocation8 + $0x4] sm:$0xf]
        %v458 = vld [vmem:[#allocation8 + $0x8] sm:$0xf]
        %v459 = vld [vmem:[#allocation8 + $0xc] sm:$0xf]
        %v460 = vld [vmem:[%s4] sm:$0x1]
        %v462 = vperm.slane %v460, 0
        %v468 = vunpack.c.l.b16 %v456
        %v469 = vunpack.c.l.b16 %v457
        %v470 = vunpack.c.l.b16 %v458
        %v471 = vunpack.c.l.b16 %v459
        %v472 = vpack.c.b16 %v469, %v468
        %v473 = vpack.c.b16 %v471, %v470
        %476 = vmatpush.bf16.msra.mxu0 0
        %477 = vmatpush.bf16.msra.mxu0 0
        %478 = vmatpush.bf16.msra.mxu0 0
        %479 = vmatpush.bf16.msra.mxu0 0
        %480 = vmatpush.bf16.msra.mxu0 0
        %481 = vmatpush.bf16.msra.mxu0 0
        %482 = vmatpush.bf16.msra.mxu0 %v473
        %483 = vmatpush.bf16.msra.mxu0 %v472
        %484 = vmatmul.bf16.gmra.mxu0 %v440
        %v485 = vpop.f32.mrf.mxu0
        %v486 = vadd.f32 %v462, %v485
        %v487 = vpop.f32.mrf.mxu0
        %488 = vdwg.mxu0
        %v489 = vpack.c.bf16 %v486, %v486
        %v490 = vld [vmem:[#allocation9] sm:$0xf]
        %v491 = vld [vmem:[#allocation9 + $0x4] sm:$0xf]
        %v492 = vld [vmem:[#allocation9 + $0x8] sm:$0xf]
        %v493 = vld [vmem:[#allocation9 + $0xc] sm:$0xf]
        %v494 = vld [vmem:[%s6] sm:$0x1]
        %v496 = vperm.slane %v494, 0
        %v502 = vunpack.c.l.b16 %v490
        %v503 = vunpack.c.l.b16 %v491
        %v504 = vunpack.c.l.b16 %v492
        %v505 = vunpack.c.l.b16 %v493
        %v506 = vpack.c.b16 %v503, %v502
        %v507 = vpack.c.b16 %v505, %v504
        %510 = vmatpush.bf16.msra.mxu0 0
        %511 = vmatpush.bf16.msra.mxu0 0
        %512 = vmatpush.bf16.msra.mxu0 0
        %513 = vmatpush.bf16.msra.mxu0 0
        %514 = vmatpush.bf16.msra.mxu0 0
        %515 = vmatpush.bf16.msra.mxu0 0
        %516 = vmatpush.bf16.msra.mxu0 %v507
        %517 = vmatpush.bf16.msra.mxu0 %v506
        %518 = vmatmul.bf16.gmra.mxu0 %v440
        %v519 = vpop.f32.mrf.mxu0
        %v520 = vadd.f32 %v496, %v519
        %v521 = vpop.f32.mrf.mxu0
        %522 = vdwg.mxu0
        %v523 = vpack.c.bf16 %v520, %v520
        %vm524 = vcmask 64512
        %v526 = vsel %vm524, %v455, 0
        %v529 = vsel %vm524, %v489, 0
        %531 = vmatpush.bf16.xpose.msra.mxu0 0
        %532 = vmatpush.bf16.xpose.msra.mxu0 0
        %533 = vmatpush.bf16.xpose.msra.mxu0 0
        %534 = vmatpush.bf16.xpose.msra.mxu0 0
        %535 = vmatpush.bf16.xpose.msra.mxu0 0
        %536 = vmatpush.bf16.xpose.msra.mxu0 0
        %537 = vmatpush.bf16.xpose.msra.mxu0 0
        %538 = vmatpush.bf16.xpose.msra.mxu0 %v529
        %539 = vmatmul.bf16.gmra.mxu0 %v526
        %v540 = vpop.f32.mrf.mxu0
        %v541 = vadd.f32 0.0, %v540
        %v542 = vpop.f32.mrf.mxu0
        %543 = vdwg.mxu0
        %v544 = vsel %vm524, %v541, -inf
        %545 = vmax.xlane.f32.xlu0 %v544
        %v546 = vpop.xlane.xlu0 %545
        %v547 = vsub.f32 %v541, %v546
        %v548 = vmul.f32 %v547, 1.442695
        %v549 = vpow.pop %v548
        %v550 = vsel %vm524, %v549, 0.0
        %551 = vadd.xlane.f32.xlu0 %v550
        %v552 = vpop.xlane.xlu0 %551
        %v553 = vrcp.pop %v552
        %v554 = vmul.f32 %v553, 0.17677669
        %v555 = vmul.f32 %v549, %v554
        %v556 = vpack.c.bf16 %v555, %v555
        %v558 = vsel %vm524, %v556, 0
        %vm560 = vcmask 1043456
        %v562 = vsel %vm560, %v523, 0
        %564 = vmatpush.bf16.msra.mxu0 0
        %565 = vmatpush.bf16.msra.mxu0 0
        %566 = vmatpush.bf16.msra.mxu0 0
        %567 = vmatpush.bf16.msra.mxu0 0
        %568 = vmatpush.bf16.msra.mxu0 0
        %569 = vmatpush.bf16.msra.mxu0 0
        %570 = vmatpush.bf16.msra.mxu0 0
        %571 = vmatpush.bf16.msra.mxu0 %v562
        %572 = vmatmul.bf16.gmra.mxu0 %v558
        %v573 = vpop.f32.mrf.mxu0
        %v574 = vadd.f32 0.0, %v573
        %v575 = vpop.f32.mrf.mxu0
        %576 = vdwg.mxu0
        %577 = vst.msk [vmem:[#allocation2] sm:$0xff] %vm524, %v574
        %v579 = vunpack.c.l.b16 %v455
        %v580 = vpack.c.b16 %v579, %v579
        %581 = vrot.lane.b32.xlu0 %v580, 120
        %v582 = vpop.permute.xlu0 %581
        %v584 = vunpack.c.l.b16 %v489
        %v585 = vpack.c.b16 %v584, %v584
        %586 = vrot.lane.b32.xlu0 %v585, 120
        %v587 = vpop.permute.xlu0 %586
        %v589 = vsel %vm524, %v582, 0
        %v592 = vsel %vm524, %v587, 0
        %594 = vmatpush.bf16.xpose.msra.mxu0 0
        %595 = vmatpush.bf16.xpose.msra.mxu0 0
        %596 = vmatpush.bf16.xpose.msra.mxu0 0
        %597 = vmatpush.bf16.xpose.msra.mxu0 0
        %598 = vmatpush.bf16.xpose.msra.mxu0 0
        %599 = vmatpush.bf16.xpose.msra.mxu0 0
        %600 = vmatpush.bf16.xpose.msra.mxu0 0
        %601 = vmatpush.bf16.xpose.msra.mxu0 %v592
        %602 = vmatmul.bf16.gmra.mxu0 %v589
        %v603 = vpop.f32.mrf.mxu0
        %v604 = vadd.f32 0.0, %v603
        %v605 = vpop.f32.mrf.mxu0
        %606 = vdwg.mxu0
        %v607 = vsel %vm524, %v604, -inf
        %608 = vmax.xlane.f32.xlu0 %v607
        %v609 = vpop.xlane.xlu0 %608
        %v610 = vsub.f32 %v604, %v609
        %v611 = vmul.f32 %v610, 1.442695
        %v612 = vpow.pop %v611
        %v613 = vsel %vm524, %v612, 0.0
        %614 = vadd.xlane.f32.xlu0 %v613
        %v615 = vpop.xlane.xlu0 %614
        %v616 = vrcp.pop %v615
        %v617 = vmul.f32 %v616, 0.17677669
        %v618 = vmul.f32 %v612, %v617
        %v619 = vpack.c.bf16 %v618, %v618
        %v621 = vunpack.c.l.b16 %v523
        %v622 = vpack.c.b16 %v621, %v621
        %623 = vrot.lane.b32.xlu0 %v622, 120
        %v624 = vpop.permute.xlu0 %623
        %v626 = vsel %vm524, %v619, 0
        %v629 = vsel %vm560, %v624, 0
        %631 = vmatpush.bf16.msra.mxu0 0
        %632 = vmatpush.bf16.msra.mxu0 0
        %633 = vmatpush.bf16.msra.mxu0 0
        %634 = vmatpush.bf16.msra.mxu0 0
        %635 = vmatpush.bf16.msra.mxu0 0
        %636 = vmatpush.bf16.msra.mxu0 0
        %637 = vmatpush.bf16.msra.mxu0 0
        %638 = vmatpush.bf16.msra.mxu0 %v629
        %639 = vmatmul.bf16.gmra.mxu0 %v626
        %v640 = vpop.f32.mrf.mxu0
        %v641 = vadd.f32 0.0, %v640
        %v642 = vpop.f32.mrf.mxu0
        %643 = vdwg.mxu0
        %645 = vrot.lane.b32.xlu0 %v641, 8
        %v646 = vpop.permute.xlu0 %645
        %vm648 = vcmask 130112
        %649 = vst.msk [vmem:[#allocation2] sm:$0xff] %vm648, %v646
        %650 = vrot.lane.b32.xlu0 %v580, 112
        %v651 = vpop.permute.xlu0 %650
        %652 = vrot.lane.b32.xlu0 %v585, 112
        %v653 = vpop.permute.xlu0 %652
        %v655 = vsel %vm524, %v651, 0
        %v658 = vsel %vm524, %v653, 0
        %660 = vmatpush.bf16.xpose.msra.mxu0 0
        %661 = vmatpush.bf16.xpose.msra.mxu0 0
        %662 = vmatpush.bf16.xpose.msra.mxu0 0
        %663 = vmatpush.bf16.xpose.msra.mxu0 0
        %664 = vmatpush.bf16.xpose.msra.mxu0 0
        %665 = vmatpush.bf16.xpose.msra.mxu0 0
        %666 = vmatpush.bf16.xpose.msra.mxu0 0
        %667 = vmatpush.bf16.xpose.msra.mxu0 %v658
        %668 = vmatmul.bf16.gmra.mxu0 %v655
        %v669 = vpop.f32.mrf.mxu0
        %v670 = vadd.f32 0.0, %v669
        %v671 = vpop.f32.mrf.mxu0
        %672 = vdwg.mxu0
        %v673 = vsel %vm524, %v670, -inf
        %674 = vmax.xlane.f32.xlu0 %v673
        %v675 = vpop.xlane.xlu0 %674
        %v676 = vsub.f32 %v670, %v675
        %v677 = vmul.f32 %v676, 1.442695
        %v678 = vpow.pop %v677
        %v679 = vsel %vm524, %v678, 0.0
        %680 = vadd.xlane.f32.xlu0 %v679
        %v681 = vpop.xlane.xlu0 %680
        %v682 = vrcp.pop %v681
        %v683 = vmul.f32 %v682, 0.17677669
        %v684 = vmul.f32 %v678, %v683
        %v685 = vpack.c.bf16 %v684, %v684
        %686 = vrot.lane.b32.xlu0 %v622, 112
        %v687 = vpop.permute.xlu0 %686
        %v689 = vsel %vm524, %v685, 0
        %v692 = vsel %vm560, %v687, 0
        %694 = vmatpush.bf16.msra.mxu0 0
        %695 = vmatpush.bf16.msra.mxu0 0
        %696 = vmatpush.bf16.msra.mxu0 0
        %697 = vmatpush.bf16.msra.mxu0 0
        %698 = vmatpush.bf16.msra.mxu0 0
        %699 = vmatpush.bf16.msra.mxu0 0
        %700 = vmatpush.bf16.msra.mxu0 0
        %701 = vmatpush.bf16.msra.mxu0 %v692
        %702 = vmatmul.bf16.gmra.mxu0 %v689
        %v703 = vpop.f32.mrf.mxu0
        %v704 = vadd.f32 0.0, %v703
        %v705 = vpop.f32.mrf.mxu0
        %706 = vdwg.mxu0
        %708 = vrot.lane.b32.xlu0 %v704, 16
        %v709 = vpop.permute.xlu0 %708
        %vm711 = vcmask 195712
        %712 = vst.msk [vmem:[#allocation2] sm:$0xff] %vm711, %v709
        %713 = vrot.lane.b32.xlu0 %v580, 104
        %v714 = vpop.permute.xlu0 %713
        %715 = vrot.lane.b32.xlu0 %v585, 104
        %v716 = vpop.permute.xlu0 %715
        %v718 = vsel %vm524, %v714, 0
        %v721 = vsel %vm524, %v716, 0
        %723 = vmatpush.bf16.xpose.msra.mxu0 0
        %724 = vmatpush.bf16.xpose.msra.mxu0 0
        %725 = vmatpush.bf16.xpose.msra.mxu0 0
        %726 = vmatpush.bf16.xpose.msra.mxu0 0
        %727 = vmatpush.bf16.xpose.msra.mxu0 0
        %728 = vmatpush.bf16.xpose.msra.mxu0 0
        %729 = vmatpush.bf16.xpose.msra.mxu0 0
        %730 = vmatpush.bf16.xpose.msra.mxu0 %v721
        %731 = vmatmul.bf16.gmra.mxu0 %v718
        %v732 = vpop.f32.mrf.mxu0
        %v733 = vadd.f32 0.0, %v732
        %v734 = vpop.f32.mrf.mxu0
        %735 = vdwg.mxu0
        %v736 = vsel %vm524, %v733, -inf
        %737 = vmax.xlane.f32.xlu0 %v736
        %v738 = vpop.xlane.xlu0 %737
        %v739 = vsub.f32 %v733, %v738
        %v740 = vmul.f32 %v739, 1.442695
        %v741 = vpow.pop %v740
        %v742 = vsel %vm524, %v741, 0.0
        %743 = vadd.xlane.f32.xlu0 %v742
        %v744 = vpop.xlane.xlu0 %743
        %v745 = vrcp.pop %v744
        %v746 = vmul.f32 %v745, 0.17677669
        %v747 = vmul.f32 %v741, %v746
        %v748 = vpack.c.bf16 %v747, %v747
        %749 = vrot.lane.b32.xlu0 %v622, 104
        %v750 = vpop.permute.xlu0 %749
        %v752 = vsel %vm524, %v748, 0
        %v755 = vsel %vm560, %v750, 0
        %757 = vmatpush.bf16.msra.mxu0 0
        %758 = vmatpush.bf16.msra.mxu0 0
        %759 = vmatpush.bf16.msra.mxu0 0
        %760 = vmatpush.bf16.msra.mxu0 0
        %761 = vmatpush.bf16.msra.mxu0 0
        %762 = vmatpush.bf16.msra.mxu0 0
        %763 = vmatpush.bf16.msra.mxu0 0
        %764 = vmatpush.bf16.msra.mxu0 %v755
        %765 = vmatmul.bf16.gmra.mxu0 %v752
        %v766 = vpop.f32.mrf.mxu0
        %v767 = vadd.f32 0.0, %v766
        %v768 = vpop.f32.mrf.mxu0
        %769 = vdwg.mxu0
        %771 = vrot.lane.b32.xlu0 %v767, 24
        %v772 = vpop.permute.xlu0 %771
        %vm774 = vcmask 261312
        %775 = vst.msk [vmem:[#allocation2] sm:$0xff] %vm774, %v772
        %v776 = vld [vmem:[#allocation2] sm:$0xff]
        %v777 = vpack.c.bf16 %v776, %v776
        %v778 = vld [vmem:[#allocation11] sm:$0xf]
        %v779 = vld [vmem:[#allocation11 + $0x4] sm:$0xf]
        %v780 = vld [vmem:[#allocation11 + $0x8] sm:$0xf]
        %v781 = vld [vmem:[#allocation11 + $0xc] sm:$0xf]
        %v782 = vld [vmem:[%s8] sm:$0x1]
        %v784 = vperm.slane %v782, 0
        %v790 = vunpack.c.l.b16 %v778
        %v791 = vunpack.c.l.b16 %v779
        %v792 = vunpack.c.l.b16 %v780
        %v793 = vunpack.c.l.b16 %v781
        %v794 = vpack.c.b16 %v791, %v790
        %v795 = vpack.c.b16 %v793, %v792
        %v799 = vsel %vm438, %v777, 0
        %801 = vmatpush.bf16.msra.mxu0 0
        %802 = vmatpush.bf16.msra.mxu0 0
        %803 = vmatpush.bf16.msra.mxu0 0
        %804 = vmatpush.bf16.msra.mxu0 0
        %805 = vmatpush.bf16.msra.mxu0 0
        %806 = vmatpush.bf16.msra.mxu0 0
        %807 = vmatpush.bf16.msra.mxu0 %v795
        %808 = vmatpush.bf16.msra.mxu0 %v794
        %809 = vmatmul.bf16.gmra.mxu0 %v799
        %v810 = vpop.f32.mrf.mxu0
        %v811 = vadd.f32 %v784, %v810
        %v812 = vpop.f32.mrf.mxu0
        %813 = vdwg.mxu0
        %814 = vst.msk [vmem:[%s415] sm:$0xff] %vm438, %v811
        %s815 = sand.u32 %s230, 1
        %s816 = scalar_lea.sflag [#allocation5], %s815
        %s817 = sand.u32 %s230, 1
        %s818 = smul.addr %s817, 8
        %s819 = scalar_lea.vmem [#allocation12], %s818
        // Predicated region
        $region77: #{tpu_custom_call.1} parent=55 // pred_check
          %p820 = pneg %p240
        $region78: #{tpu_custom_call.1} parent=55 // pred_check_branch
          %822 = sbr.rel (%p820) target = $region80
        $region79: #{tpu_custom_call.1} parent=55 // pred_region
          %824 = vsyncadd %s816, 0
          %s825 = smul.addr %s28, 8
          %s826 = scalar_lea.hbm %s9, %s825
          %s828 = sshll.u32 %s819, 4
          %s829 = int_to_ptr.vmem [resolvable:$true] %s828
          %s830 = sshll.u32 %s826, 4
          %s831 = int_to_ptr.hbm [resolvable:$true] %s830
          %833 = dma.vmem_to_hbm [thread:$0]  %s829, 128, %s831, %s816
        $region80: #{tpu_custom_call.1} parent=55 // pred_fallthru
          _
      $region56: #{tpu_custom_call.1} parent=5 // pred_fallthru
        _
      %p834 = scmp.le.s32.totalorder 2, %s23
      // Predicated region
      $region81: #{tpu_custom_call.1} parent=5 // pred_check
        %p835 = pneg %p834
      $region82: #{tpu_custom_call.1} parent=5 // pred_check_branch
        %837 = sbr.rel (%p835) target = $region84
      $region83: #{tpu_custom_call.1} parent=5 // pred_region
        %s838 = ssub.s32 %s23, 2
        // Predicated region
        $region85: #{tpu_custom_call.1} parent=83 // pred_check
          %p839 = pneg %p246
        $region86: #{tpu_custom_call.1} parent=83 // pred_check_branch
          %841 = sbr.rel (%p839) target = $region88
        $region87: #{tpu_custom_call.1} parent=83 // pred_region
          %s842 = sand.u32 %s231, 1
          %s843 = scalar_lea.sflag [#allocation5], %s842
          %s844 = sand.u32 %s231, 1
          %s845 = smul.addr %s844, 8
          %s846 = scalar_lea.vmem [#allocation12], %s845
          %848 = dma.done %s843, 128
        $region88: #{tpu_custom_call.1} parent=83 // pred_fallthru
          _
      $region84: #{tpu_custom_call.1} parent=5 // pred_fallthru
        _
    $region6: #{tpu_custom_call.1} parent=1 // loop_footer
      %s27 = sadd.s32 1, %s23
    $region7: #{tpu_custom_call.1} parent=1 // loop_footer_branch
      %22 = sbr.rel target = $region3
    $region8: #{tpu_custom_call.1} parent=1 // loop_exit
      _
    %849 = vsyncpa [#allocation4], 1
    %s850 = scalar_lea.sflag [#allocation4], 1
    %851 = vsyncpa %s850, 1
    %852 = vsyncpa [#allocation7], 1
    %853 = vsyncpa [#allocation10], 1
    %854 = vsyncpa [#allocation5], 1
    %s855 = scalar_lea.sflag [#allocation5], 1
    %856 = vsyncpa %s855, 1

</llo_original>
